<compile_context>
chip_gen: v7x
topology: tpu7x:2x2x1
jax: 0.10.0
libtpu: 0.0.40
codegen_flags: <defaults>
</compile_context>

<pallas_src>
import jax
import jax.numpy as jnp
from jax.experimental import pallas as pl
from jax.experimental.pallas import tpu as pltpu

LANE = 128
SUBLANE = 8


def _round_up(n, m):
    return ((n + m - 1) // m) * m


def _pad_to(a, shape):
    pads = [(0, s - d) for d, s in zip(a.shape, shape)]
    return jnp.pad(a, pads)


# -----------------------------------------------------------------------------
# Pallas kernel: full MLP forward for one batch tile.
# -----------------------------------------------------------------------------
def _make_kernel(n_mid):
    def kernel(*refs):
        if n_mid > 0:
            (x_ref, y_ref, d_ref, w1x_ref, w1y_ref, b1_ref, wh_ref, bh_ref,
             w3_ref, b3_ref, wcx_ref, wcd_ref, bc_ref, out_ref) = refs
        else:
            (x_ref, y_ref, d_ref, w1x_ref, w1y_ref, b1_ref,
             w3_ref, b3_ref, wcx_ref, wcd_ref, bc_ref, out_ref) = refs
            wh_ref = bh_ref = None

        # Layer 1: Linear(feat + classes, hidden) + ReLU.
        # torch.cat([x, y]) is folded as two dots (w1 split row-wise in the
        # wrapper) accumulated in f32 -> no wrapper-side concat copy.
        h = (jnp.dot(x_ref[...].astype(jnp.bfloat16), w1x_ref[...],
                     preferred_element_type=jnp.float32)
             + jnp.dot(y_ref[...].astype(jnp.bfloat16), w1y_ref[...],
                       preferred_element_type=jnp.float32))
        h = jnp.maximum(h + b1_ref[...], 0.0)

        # (layer_num - 3) x [Linear(hidden, hidden) + ReLU].  Static unroll is
        # fine for small n_mid; switch to lax.fori_loop(..., unroll=True) if
        # layer_num ever grows large, to keep vreg live ranges bounded.
        for i in range(n_mid):
            h = jnp.dot(h.astype(jnp.bfloat16), wh_ref[i],
                        preferred_element_type=jnp.float32)
            h = jnp.maximum(h + bh_ref[i], 0.0)

        # Linear(hidden, comb_dim) + ReLU.
        c = jnp.dot(h.astype(jnp.bfloat16), w3_ref[...],
                    preferred_element_type=jnp.float32)
        c = jnp.maximum(c + b3_ref[...], 0.0)

        # combine_layer: Linear(comb_dim * 2, 1) + Sigmoid.  Output width 1 ->
        # VPU multiply + XLU lane reduce (keeps the MXU out of it); the cat is
        # folded into two per-row reductions plus an SMEM scalar bias.
        logit = (jnp.sum(c * wcx_ref[...], axis=-1, keepdims=True)
                 + jnp.sum(d_ref[...].astype(jnp.float32) * wcd_ref[...],
                           axis=-1, keepdims=True)
                 + bc_ref[0])
        out_ref[...] = jax.nn.sigmoid(logit).astype(out_ref.dtype)

    return kernel


# -----------------------------------------------------------------------------
# Wrapper
# -----------------------------------------------------------------------------
def value_estimator_forward(x, y, y_hat_diff, params, *, tile_b=2048,
                            vmem_limit_bytes=32 * 1024 * 1024):
    """ValueEstimator forward pass as a batch-tiled Pallas TPU kernel.

    VMEM budget: double-buffered activation blocks are ~ tile_b * 4 KiB total
    (narrow blocks are lane-padded to 128 in VMEM), so tile_b=2048 uses ~8 MiB
    and tile_b=4096 ~16 MiB; raise vmem_limit_bytes before going past that on
    v7x (64 MiB physical).
    """
    (w1, b1, wh, bh, w3, b3, wc, bc) = params
    batch = x.shape[0]
    feat, classes = x.shape[1], y.shape[1]
    hidden = w1.shape[1]
    comb = w3.shape[1]
    n_mid = wh.shape[0]

    h_pad = _round_up(hidden, LANE)
    c_pad = _round_up(comb, LANE)

    # ---- batch tiling ------------------------------------------------------
    # No wrapper-side batch padding: grid = cdiv(batch, tile_b); Pallas masks
    # the ragged final block (its garbage rows only produce garbage in their
    # own masked-out output rows, which never reach HBM).
    tile_b = max(SUBLANE, min(int(tile_b), _round_up(batch, SUBLANE)))
    tile_b = _round_up(tile_b, SUBLANE)
    n_tiles = pl.cdiv(batch, tile_b)

    # ---- weight layout plumbing (tiny one-time arrays; activations untouched)
    # w1 is split row-wise so torch.cat([x, y]) folds into two dots.  Hidden /
    # comb dims are zero-padded to lane width (padded channels stay exactly 0
    # through ReLU and contribute nothing).
    w1x_p = _pad_to(w1[:feat], (feat, h_pad)).astype(jnp.bfloat16)
    w1y_p = _pad_to(w1[feat:], (classes, h_pad)).astype(jnp.bfloat16)
    b1_p = _pad_to(b1, (1, h_pad)).astype(jnp.float32)
    if n_mid > 0:
        wh_p = _pad_to(wh, (n_mid, h_pad, h_pad)).astype(jnp.bfloat16)
        bh_p = _pad_to(bh, (n_mid, 1, h_pad)).astype(jnp.float32)
    w3_p = _pad_to(w3, (h_pad, c_pad)).astype(jnp.bfloat16)
    b3_p = _pad_to(b3, (1, c_pad)).astype(jnp.float32)
    # Combine-layer weight rows for the VPU reduce (f32): c-part padded to the
    # padded comb width, y_hat_diff-part left at its true width (no lane pad).
    wcx_p = _pad_to(wc[:comb, 0][None, :], (1, c_pad)).astype(jnp.float32)
    wcd_p = wc[comb:, 0][None, :].astype(jnp.float32)          # (1, comb)
    bc_p = bc.reshape(-1).astype(jnp.float32)                  # (1,) -> SMEM

    # ---- BlockSpecs ----------------------------------------------------------
    def act_spec(width):                       # batch-tiled activation stream
        return pl.BlockSpec((tile_b, width), lambda b: (b, 0))

    def resident2(arr):   # weights/biases: constant index_map -> VMEM resident
        return pl.BlockSpec(arr.shape, lambda b: (0, 0))

    def resident3(arr):
        return pl.BlockSpec(arr.shape, lambda b: (0, 0, 0))

    smem_spec = pl.BlockSpec(memory_space=pltpu.MemorySpace.SMEM)

    operands = [x, y, y_hat_diff, w1x_p, w1y_p, b1_p]
    in_specs = [act_spec(feat), act_spec(classes), act_spec(comb),
                resident2(w1x_p), resident2(w1y_p), resident2(b1_p)]
    if n_mid > 0:
        operands += [wh_p, bh_p]
        in_specs += [resident3(wh_p), resident3(bh_p)]
    operands += [w3_p, b3_p, wcx_p, wcd_p, bc_p]
    in_specs += [resident2(w3_p), resident2(b3_p),
                 resident2(wcx_p), resident2(wcd_p), smem_spec]

    out = pl.pallas_call(
        _make_kernel(n_mid),
        out_shape=jax.ShapeDtypeStruct((batch, 1), jnp.float32),
        grid=(n_tiles,),
        in_specs=in_specs,
        out_specs=pl.BlockSpec((tile_b, 1), lambda b: (b, 0)),
        compiler_params=pltpu.CompilerParams(
            dimension_semantics=("parallel",),
            vmem_limit_bytes=vmem_limit_bytes),
    )(*operands)
    return out


# -----------------------------------------------------------------------------
# Deterministic parameter init (matches nn.Linear shapes; synthetic values)
# -----------------------------------------------------------------------------
def init_params(key, feat_num, num_classes, hidden_num, layer_num, comb_dim):
    def linear(key, fan_in, fan_out):
        kw, kb = jax.random.split(key)
        bound = 1.0 / jnp.sqrt(float(fan_in))
        w = jax.random.uniform(kw, (fan_in, fan_out), jnp.float32, -bound, bound)
        b = jax.random.uniform(kb, (1, fan_out), jnp.float32, -bound, bound)
        return w, b

    n_mid = layer_num - 3
    keys = jax.random.split(key, 3 + max(n_mid, 0))

    w1, b1 = linear(keys[0], feat_num + num_classes, hidden_num)

    wh_list, bh_list = [], []
    for i in range(n_mid):
        w, b = linear(keys[1 + i], hidden_num, hidden_num)
        wh_list.append(w)
        bh_list.append(b)
    if n_mid > 0:
        wh = jnp.stack(wh_list)                 # (n_mid, H, H)
        bh = jnp.stack(bh_list)                 # (n_mid, 1, H)
    else:
        wh = jnp.zeros((0, hidden_num, hidden_num), jnp.float32)
        bh = jnp.zeros((0, 1, hidden_num), jnp.float32)

    w3, b3 = linear(keys[1 + n_mid], hidden_num, comb_dim)
    wc, bc = linear(keys[2 + n_mid], comb_dim * 2, 1)
    return (w1, b1, wh, bh, w3, b3, wc, bc)


# -----------------------------------------------------------------------------
# Pure-JAX reference (mirrors the PyTorch forward exactly, f32)
# -----------------------------------------------------------------------------
def reference_forward(x, y, y_hat_diff, params):
    (w1, b1, wh, bh, w3, b3, wc, bc) = params
    h = jnp.maximum(jnp.concatenate([x, y], axis=1) @ w1 + b1, 0.0)
    for i in range(wh.shape[0]):
        h = jnp.maximum(h @ wh[i] + bh[i], 0.0)
    c = jnp.maximum(h @ w3 + b3, 0.0)
    z = jnp.concatenate([c, y_hat_diff], axis=1) @ wc + bc
    return jax.nn.sigmoid(z)


if __name__ == "__main__":
    feat_num, num_classes, hidden_num, layer_num, comb_dim = 16, 4, 32, 5, 16

    key = jax.random.PRNGKey(0)
    kp, kd = jax.random.split(key)
    params = init_params(kp, feat_num, num_classes, hidden_num, layer_num, comb_dim)

    def make_inputs(k, batch):
        kx, ky, kz = jax.random.split(k, 3)
        x = jax.random.normal(kx, (batch, feat_num), jnp.float32)
        y_idx = jax.random.randint(ky, (batch,), 0, num_classes)
        y = jax.nn.one_hot(y_idx, num_classes, dtype=jnp.float32)
        d = jnp.abs(jax.random.normal(kz, (batch, comb_dim), jnp.float32))
        return x, y, d

    # Small single-tile check.
    x, y, d = make_inputs(jax.random.PRNGKey(1), 8)
    out = jax.block_until_ready(value_estimator_forward(x, y, d, params))
    ref = reference_forward(x, y, d, params)
    assert out.shape == (8, 1)
    assert jnp.allclose(out, ref, rtol=2e-2, atol=2e-2)

    # Multi-tile check (exercises grid, resident weights, ragged final block).
    x2, y2, d2 = make_inputs(jax.random.PRNGKey(2), 200)
    out2 = jax.block_until_ready(
        value_estimator_forward(x2, y2, d2, params, tile_b=64))
    ref2 = reference_forward(x2, y2, d2, params)
    assert out2.shape == (200, 1)
    assert jnp.allclose(out2, ref2, rtol=2e-2, atol=2e-2)

    print("KERNEL_OK")
</pallas_src>

<mosaic_0001>
module attributes {stable_mosaic.version = 11 : i64} {
  func.func @kernel(%arg0: i32, %arg1: memref<8x16xf32, #tpu.memory_space<vmem>>, %arg2: memref<8x4xf32, #tpu.memory_space<vmem>>, %arg3: memref<8x16xf32, #tpu.memory_space<vmem>>, %arg4: memref<16x128xbf16, #tpu.memory_space<vmem>>, %arg5: memref<4x128xbf16, #tpu.memory_space<vmem>>, %arg6: memref<1x128xf32, #tpu.memory_space<vmem>>, %arg7: memref<2x128x128xbf16, #tpu.memory_space<vmem>>, %arg8: memref<2x1x128xf32, #tpu.memory_space<vmem>>, %arg9: memref<128x128xbf16, #tpu.memory_space<vmem>>, %arg10: memref<1x128xf32, #tpu.memory_space<vmem>>, %arg11: memref<1x128xf32, #tpu.memory_space<vmem>>, %arg12: memref<1x16xf32, #tpu.memory_space<vmem>>, %arg13: memref<1xf32, #tpu.memory_space<smem>>, %arg14: memref<8x1xf32, #tpu.memory_space<vmem>>) attributes {dimension_semantics = [#tpu.dimension_semantics<parallel>], iteration_bounds = array<i64: 1>, scalar_prefetch = 0 : i64, scratch_operands = 0 : i64, tpu.core_type = #tpu.core_type<tc>, window_params = [{transform_indices = @transform_0, window_bounds = array<i64: 8, 16>}, {transform_indices = @transform_1, window_bounds = array<i64: 8, 4>}, {transform_indices = @transform_2, window_bounds = array<i64: 8, 16>}, {pipeline_mode = #tpu.pipeline_mode<synchronous>, transform_indices = @transform_3, window_bounds = array<i64: 16, 128>}, {pipeline_mode = #tpu.pipeline_mode<synchronous>, transform_indices = @transform_4, window_bounds = array<i64: 4, 128>}, {pipeline_mode = #tpu.pipeline_mode<synchronous>, transform_indices = @transform_5, window_bounds = array<i64: 1, 128>}, {pipeline_mode = #tpu.pipeline_mode<synchronous>, transform_indices = @transform_6, window_bounds = array<i64: 2, 128, 128>}, {pipeline_mode = #tpu.pipeline_mode<synchronous>, transform_indices = @transform_7, window_bounds = array<i64: 2, 1, 128>}, {pipeline_mode = #tpu.pipeline_mode<synchronous>, transform_indices = @transform_8, window_bounds = array<i64: 128, 128>}, {pipeline_mode = #tpu.pipeline_mode<synchronous>, transform_indices = @transform_9, window_bounds = array<i64: 1, 128>}, {pipeline_mode = #tpu.pipeline_mode<synchronous>, transform_indices = @transform_10, window_bounds = array<i64: 1, 128>}, {pipeline_mode = #tpu.pipeline_mode<synchronous>, transform_indices = @transform_11, window_bounds = array<i64: 1, 16>}, {transform_indices = @transform_12, window_bounds = array<i64: 1>}, {transform_indices = @transform_13, window_bounds = array<i64: 8, 1>}]} {
    %c0 = arith.constant 0 : index
    %c0_0 = arith.constant 0 : index
    %0 = vector.load %arg1[%c0, %c0_0] : memref<8x16xf32, #tpu.memory_space<vmem>>, vector<8x16xf32>
    %1 = arith.truncf %0 : vector<8x16xf32> to vector<8x16xbf16>
    %c0_1 = arith.constant 0 : index
    %c0_2 = arith.constant 0 : index
    %2 = vector.load %arg4[%c0_1, %c0_2] : memref<16x128xbf16, #tpu.memory_space<vmem>>, vector<16x128xbf16>
    %cst = arith.constant dense<0.000000e+00> : vector<8x128xf32>
    %3 = tpu.matmul %1, %2, %cst {dimension_numbers = #tpu.dot_dimension_numbers<[1], [0], [0], [1], [0, 0, 1, 1], [], []>} : vector<8x16xbf16>, vector<16x128xbf16>, vector<8x128xf32> -> vector<8x128xf32>
    %c0_3 = arith.constant 0 : index
    %c0_4 = arith.constant 0 : index
    %4 = vector.load %arg2[%c0_3, %c0_4] : memref<8x4xf32, #tpu.memory_space<vmem>>, vector<8x4xf32>
    %5 = arith.truncf %4 : vector<8x4xf32> to vector<8x4xbf16>
    %c0_5 = arith.constant 0 : index
    %c0_6 = arith.constant 0 : index
    %6 = vector.load %arg5[%c0_5, %c0_6] : memref<4x128xbf16, #tpu.memory_space<vmem>>, vector<4x128xbf16>
    %cst_7 = arith.constant dense<0.000000e+00> : vector<8x128xf32>
    %7 = tpu.matmul %5, %6, %cst_7 {dimension_numbers = #tpu.dot_dimension_numbers<[1], [0], [0], [1], [0, 0, 1, 1], [], []>} : vector<8x4xbf16>, vector<4x128xbf16>, vector<8x128xf32> -> vector<8x128xf32>
    %8 = arith.addf %3, %7 : vector<8x128xf32>
    %c0_8 = arith.constant 0 : index
    %c0_9 = arith.constant 0 : index
    %9 = vector.load %arg6[%c0_8, %c0_9] : memref<1x128xf32, #tpu.memory_space<vmem>>, vector<1x128xf32>
    %10 = vector.broadcast %9 : vector<1x128xf32> to vector<8x128xf32>
    %11 = arith.addf %8, %10 : vector<8x128xf32>
    %cst_10 = arith.constant 0.000000e+00 : f32
    %12 = vector.broadcast %cst_10 : f32 to vector<8x128xf32>
    %13 = arith.maximumf %11, %12 : vector<8x128xf32>
    %14 = arith.truncf %13 : vector<8x128xf32> to vector<8x128xbf16>
    %c0_11 = arith.constant 0 : index
    %c0_12 = arith.constant 0 : index
    %c0_13 = arith.constant 0 : index
    %15 = vector.load %arg7[%c0_11, %c0_12, %c0_13] : memref<2x128x128xbf16, #tpu.memory_space<vmem>>, vector<1x128x128xbf16>
    %16 = vector.shape_cast %15 : vector<1x128x128xbf16> to vector<128x128xbf16>
    %cst_14 = arith.constant dense<0.000000e+00> : vector<8x128xf32>
    %17 = tpu.matmul %14, %16, %cst_14 {dimension_numbers = #tpu.dot_dimension_numbers<[1], [0], [0], [1], [0, 0, 1, 1], [], []>} : vector<8x128xbf16>, vector<128x128xbf16>, vector<8x128xf32> -> vector<8x128xf32>
    %c0_15 = arith.constant 0 : index
    %c0_16 = arith.constant 0 : index
    %c0_17 = arith.constant 0 : index
    %18 = vector.load %arg8[%c0_15, %c0_16, %c0_17] : memref<2x1x128xf32, #tpu.memory_space<vmem>>, vector<1x1x128xf32>
    %19 = vector.shape_cast %18 : vector<1x1x128xf32> to vector<1x128xf32>
    %20 = vector.broadcast %19 : vector<1x128xf32> to vector<8x128xf32>
    %21 = arith.addf %17, %20 : vector<8x128xf32>
    %cst_18 = arith.constant 0.000000e+00 : f32
    %22 = vector.broadcast %cst_18 : f32 to vector<8x128xf32>
    %23 = arith.maximumf %21, %22 : vector<8x128xf32>
    %24 = arith.truncf %23 : vector<8x128xf32> to vector<8x128xbf16>
    %c1 = arith.constant 1 : index
    %c0_19 = arith.constant 0 : index
    %c0_20 = arith.constant 0 : index
    %25 = vector.load %arg7[%c1, %c0_19, %c0_20] : memref<2x128x128xbf16, #tpu.memory_space<vmem>>, vector<1x128x128xbf16>
    %26 = vector.shape_cast %25 : vector<1x128x128xbf16> to vector<128x128xbf16>
    %cst_21 = arith.constant dense<0.000000e+00> : vector<8x128xf32>
    %27 = tpu.matmul %24, %26, %cst_21 {dimension_numbers = #tpu.dot_dimension_numbers<[1], [0], [0], [1], [0, 0, 1, 1], [], []>} : vector<8x128xbf16>, vector<128x128xbf16>, vector<8x128xf32> -> vector<8x128xf32>
    %c1_22 = arith.constant 1 : index
    %c0_23 = arith.constant 0 : index
    %c0_24 = arith.constant 0 : index
    %28 = vector.load %arg8[%c1_22, %c0_23, %c0_24] : memref<2x1x128xf32, #tpu.memory_space<vmem>>, vector<1x1x128xf32>
    %29 = vector.shape_cast %28 : vector<1x1x128xf32> to vector<1x128xf32>
    %30 = vector.broadcast %29 : vector<1x128xf32> to vector<8x128xf32>
    %31 = arith.addf %27, %30 : vector<8x128xf32>
    %cst_25 = arith.constant 0.000000e+00 : f32
    %32 = vector.broadcast %cst_25 : f32 to vector<8x128xf32>
    %33 = arith.maximumf %31, %32 : vector<8x128xf32>
    %34 = arith.truncf %33 : vector<8x128xf32> to vector<8x128xbf16>
    %c0_26 = arith.constant 0 : index
    %c0_27 = arith.constant 0 : index
    %35 = vector.load %arg9[%c0_26, %c0_27] : memref<128x128xbf16, #tpu.memory_space<vmem>>, vector<128x128xbf16>
    %cst_28 = arith.constant dense<0.000000e+00> : vector<8x128xf32>
    %36 = tpu.matmul %34, %35, %cst_28 {dimension_numbers = #tpu.dot_dimension_numbers<[1], [0], [0], [1], [0, 0, 1, 1], [], []>} : vector<8x128xbf16>, vector<128x128xbf16>, vector<8x128xf32> -> vector<8x128xf32>
    %c0_29 = arith.constant 0 : index
    %c0_30 = arith.constant 0 : index
    %37 = vector.load %arg10[%c0_29, %c0_30] : memref<1x128xf32, #tpu.memory_space<vmem>>, vector<1x128xf32>
    %38 = vector.broadcast %37 : vector<1x128xf32> to vector<8x128xf32>
    %39 = arith.addf %36, %38 : vector<8x128xf32>
    %cst_31 = arith.constant 0.000000e+00 : f32
    %40 = vector.broadcast %cst_31 : f32 to vector<8x128xf32>
    %41 = arith.maximumf %39, %40 : vector<8x128xf32>
    %c0_32 = arith.constant 0 : index
    %c0_33 = arith.constant 0 : index
    %42 = vector.load %arg11[%c0_32, %c0_33] : memref<1x128xf32, #tpu.memory_space<vmem>>, vector<1x128xf32>
    %43 = vector.broadcast %42 : vector<1x128xf32> to vector<8x128xf32>
    %44 = arith.mulf %41, %43 : vector<8x128xf32>
    %cst_34 = arith.constant dense<0.000000e+00> : vector<8xf32>
    %45 = vector.multi_reduction <add>, %44, %cst_34 [1] : vector<8x128xf32> to vector<8xf32>
    %46 = vector.shape_cast %45 : vector<8xf32> to vector<8x1xf32>
    %c0_35 = arith.constant 0 : index
    %c0_36 = arith.constant 0 : index
    %47 = vector.load %arg3[%c0_35, %c0_36] : memref<8x16xf32, #tpu.memory_space<vmem>>, vector<8x16xf32>
    %c0_37 = arith.constant 0 : index
    %c0_38 = arith.constant 0 : index
    %48 = vector.load %arg12[%c0_37, %c0_38] : memref<1x16xf32, #tpu.memory_space<vmem>>, vector<1x16xf32>
    %49 = vector.broadcast %48 : vector<1x16xf32> to vector<8x16xf32>
    %50 = arith.mulf %47, %49 : vector<8x16xf32>
    %cst_39 = arith.constant dense<0.000000e+00> : vector<8xf32>
    %51 = vector.multi_reduction <add>, %50, %cst_39 [1] : vector<8x16xf32> to vector<8xf32>
    %52 = vector.shape_cast %51 : vector<8xf32> to vector<8x1xf32>
    %53 = arith.addf %46, %52 : vector<8x1xf32>
    %c0_40 = arith.constant 0 : index
    %54 = memref.load %arg13[%c0_40] : memref<1xf32, #tpu.memory_space<smem>>
    %55 = vector.broadcast %54 : f32 to vector<8x1xf32>
    %56 = arith.addf %53, %55 : vector<8x1xf32>
    %57 = arith.negf %56 : vector<8x1xf32>
    %58 = math.exp %57 : vector<8x1xf32>
    %cst_41 = arith.constant 1.000000e+00 : f32
    %59 = vector.broadcast %cst_41 : f32 to vector<8x1xf32>
    %60 = arith.addf %59, %58 : vector<8x1xf32>
    %61 = arith.divf %59, %60 : vector<8x1xf32>
    %c0_42 = arith.constant 0 : index
    %c0_43 = arith.constant 0 : index
    %62 = vector.load %arg14[%c0_42, %c0_43] : memref<8x1xf32, #tpu.memory_space<vmem>>, vector<8x1xf32>
    tpu.vector_store %arg14[%c0_42, %c0_43], %61 {strides = array<i32>} : memref<8x1xf32, #tpu.memory_space<vmem>>, vector<8x1xf32>,
    return
  }
  func.func @transform_0(%arg0: i32) -> (i32, i32) {
    %c0_i32 = arith.constant 0 : i32
    %c0_i32_0 = arith.constant 0 : i32
    return %arg0, %c0_i32 : i32, i32
  }
  func.func @transform_1(%arg0: i32) -> (i32, i32) {
    %c0_i32 = arith.constant 0 : i32
    %c0_i32_0 = arith.constant 0 : i32
    return %arg0, %c0_i32 : i32, i32
  }
  func.func @transform_2(%arg0: i32) -> (i32, i32) {
    %c0_i32 = arith.constant 0 : i32
    %c0_i32_0 = arith.constant 0 : i32
    return %arg0, %c0_i32 : i32, i32
  }
  func.func @transform_3(%arg0: i32) -> (i32, i32) {
    %c0_i32 = arith.constant 0 : i32
    %c0_i32_0 = arith.constant 0 : i32
    %c0_i32_1 = arith.constant 0 : i32
    return %c0_i32, %c0_i32_0 : i32, i32
  }
  func.func @transform_4(%arg0: i32) -> (i32, i32) {
    %c0_i32 = arith.constant 0 : i32
    %c0_i32_0 = arith.constant 0 : i32
    %c0_i32_1 = arith.constant 0 : i32
    return %c0_i32, %c0_i32_0 : i32, i32
  }
  func.func @transform_5(%arg0: i32) -> (i32, i32) {
    %c0_i32 = arith.constant 0 : i32
    %c0_i32_0 = arith.constant 0 : i32
    %c0_i32_1 = arith.constant 0 : i32
    return %c0_i32, %c0_i32_0 : i32, i32
  }
  func.func @transform_6(%arg0: i32) -> (i32, i32, i32) {
    %c0_i32 = arith.constant 0 : i32
    %c0_i32_0 = arith.constant 0 : i32
    %c0_i32_1 = arith.constant 0 : i32
    %c0_i32_2 = arith.constant 0 : i32
    return %c0_i32, %c0_i32_0, %c0_i32_1 : i32, i32, i32
  }
  func.func @transform_7(%arg0: i32) -> (i32, i32, i32) {
    %c0_i32 = arith.constant 0 : i32
    %c0_i32_0 = arith.constant 0 : i32
    %c0_i32_1 = arith.constant 0 : i32
    %c0_i32_2 = arith.constant 0 : i32
    return %c0_i32, %c0_i32_0, %c0_i32_1 : i32, i32, i32
  }
  func.func @transform_8(%arg0: i32) -> (i32, i32) {
    %c0_i32 = arith.constant 0 : i32
    %c0_i32_0 = arith.constant 0 : i32
    %c0_i32_1 = arith.constant 0 : i32
    return %c0_i32, %c0_i32_0 : i32, i32
  }
  func.func @transform_9(%arg0: i32) -> (i32, i32) {
    %c0_i32 = arith.constant 0 : i32
    %c0_i32_0 = arith.constant 0 : i32
    %c0_i32_1 = arith.constant 0 : i32
    return %c0_i32, %c0_i32_0 : i32, i32
  }
  func.func @transform_10(%arg0: i32) -> (i32, i32) {
    %c0_i32 = arith.constant 0 : i32
    %c0_i32_0 = arith.constant 0 : i32
    %c0_i32_1 = arith.constant 0 : i32
    return %c0_i32, %c0_i32_0 : i32, i32
  }
  func.func @transform_11(%arg0: i32) -> (i32, i32) {
    %c0_i32 = arith.constant 0 : i32
    %c0_i32_0 = arith.constant 0 : i32
    %c0_i32_1 = arith.constant 0 : i32
    return %c0_i32, %c0_i32_0 : i32, i32
  }
  func.func @transform_12(%arg0: i32) -> i32 {
    %c0_i32 = arith.constant 0 : i32
    %c0_i32_0 = arith.constant 0 : i32
    return %c0_i32 : i32
  }
  func.func @transform_13(%arg0: i32) -> (i32, i32) {
    %c0_i32 = arith.constant 0 : i32
    %c0_i32_0 = arith.constant 0 : i32
    return %arg0, %c0_i32 : i32, i32
  }
}

</mosaic_0001>

<llo_original>
// kernel: tpu_custom_call.1
$region0: #{tpu_custom_call.1}
  #allocation0 [shape = 'u32[]', space=smem, size = 0x4, offset = 0x4, fixed_abs, tag = 'smem constant byte address 0x4 - core index']
  #allocation1 [shape = 'u32[144,128]{1,0:T(1,128)}', space=vmem, size = 0x12000, scoped, tag = 'internal scratch']
  #allocation2 [shape = 'f32[1]{0:T(128)S(6)}', space=smem, size = 0x200, scoped, tag = 'scoped memory for tpu_custom_call.1']
  %s0 = inlined_call_operand.vmem [shape: f32[8,16], index: 0, kind: input, shape index: {}]
  %s1 = inlined_call_operand.vmem [shape: f32[8,4], index: 1, kind: input, shape index: {}]
  %s2 = inlined_call_operand.vmem [shape: f32[8,16], index: 2, kind: input, shape index: {}]
  %s3 = inlined_call_operand.vmem [shape: bf16[16,128], index: 3, kind: input, shape index: {}]
  %s4 = inlined_call_operand.vmem [shape: bf16[4,128], index: 4, kind: input, shape index: {}]
  %s5 = inlined_call_operand.vmem [shape: f32[1,128], index: 5, kind: input, shape index: {}]
  %s6 = inlined_call_operand.hbm [shape: bf16[2,128,128], index: 6, kind: input, shape index: {}]
  %s7 = inlined_call_operand.vmem [shape: f32[2,1,128], index: 7, kind: input, shape index: {}]
  %s8 = inlined_call_operand.hbm [shape: bf16[128,128], index: 8, kind: input, shape index: {}]
  %s9 = inlined_call_operand.vmem [shape: f32[1,128], index: 9, kind: input, shape index: {}]
  %s10 = inlined_call_operand.vmem [shape: f32[1,128], index: 10, kind: input, shape index: {}]
  %s11 = inlined_call_operand.vmem [shape: f32[1,16], index: 11, kind: input, shape index: {}]
  %s12 = inlined_call_operand.<no memory space> [shape: f32[1], index: 12, kind: input, shape index: {}]
  %s13 = inlined_call_operand.vmem [shape: f32[8,1], index: 13, kind: output, shape index: {}]
  %s14 = sld [smem:[#allocation0]]
  $region70: #{tpu_custom_call.1} parent=0
    _
  %s16 = ssub.s32 1, %s14
  %s17 = scalar_select 0, %s16, %s14
  %18 = sst [smem:[#allocation2]] %s12
  $region1: #{tpu_custom_call.1} parent=0
    #allocation3 [shape = 'u8[65536]{0}', space=vmem, size = 0x10000, scoped, tag = 'input window, operand 6, single buffered']
    #allocation4 [shape = 's32[1]{0}', space=sflag, size = 0x4, scoped, tag = 'scoped memory for tpu_custom_call.1']
    #allocation5 [shape = 'u8[32768]{0}', space=vmem, size = 0x8000, scoped, tag = 'input window, operand 8, single buffered']
    #allocation6 [shape = 's32[1]{0}', space=sflag, size = 0x4, scoped, tag = 'scoped memory for tpu_custom_call.1']
    %19 = vsyncpa [#allocation4], 0
    %20 = vsyncpa [#allocation6], 0
    // Predicated region
    $region2: #{tpu_custom_call.1} parent=1 // pred_check
      _
    $region3: #{tpu_custom_call.1} parent=1 // pred_check_branch
      %22 = sbr.rel (0) target = $region5
    $region4: #{tpu_custom_call.1} parent=1 // pred_region
      _
    $region5: #{tpu_custom_call.1} parent=1 // pred_fallthru
      _
    // Predicated region
    $region6: #{tpu_custom_call.1} parent=1 // pred_check
      _
    $region7: #{tpu_custom_call.1} parent=1 // pred_check_branch
      %24 = sbr.rel (0) target = $region9
    $region8: #{tpu_custom_call.1} parent=1 // pred_region
      _
    $region9: #{tpu_custom_call.1} parent=1 // pred_fallthru
      _
    // Predicated region
    $region10: #{tpu_custom_call.1} parent=1 // pred_check
      _
    $region11: #{tpu_custom_call.1} parent=1 // pred_check_branch
      %26 = sbr.rel (0) target = $region13
    $region12: #{tpu_custom_call.1} parent=1 // pred_region
      _
    $region13: #{tpu_custom_call.1} parent=1 // pred_fallthru
      _
    // Predicated region
    $region14: #{tpu_custom_call.1} parent=1 // pred_check
      _
    $region15: #{tpu_custom_call.1} parent=1 // pred_check_branch
      %28 = sbr.rel (0) target = $region17
    $region16: #{tpu_custom_call.1} parent=1 // pred_region
      _
    $region17: #{tpu_custom_call.1} parent=1 // pred_fallthru
      _
    // Predicated region
    $region18: #{tpu_custom_call.1} parent=1 // pred_check
      _
    $region19: #{tpu_custom_call.1} parent=1 // pred_check_branch
      %30 = sbr.rel (0) target = $region21
    $region20: #{tpu_custom_call.1} parent=1 // pred_region
      _
    $region21: #{tpu_custom_call.1} parent=1 // pred_fallthru
      _
    // Predicated region
    $region22: #{tpu_custom_call.1} parent=1 // pred_check
      _
    $region23: #{tpu_custom_call.1} parent=1 // pred_check_branch
      %32 = sbr.rel (0) target = $region25
    $region24: #{tpu_custom_call.1} parent=1 // pred_region
      _
    $region25: #{tpu_custom_call.1} parent=1 // pred_fallthru
      _
    // Predicated region
    $region26: #{tpu_custom_call.1} parent=1 // pred_check
      _
    $region27: #{tpu_custom_call.1} parent=1 // pred_check_branch
      %34 = sbr.rel (0) target = $region29
    $region28: #{tpu_custom_call.1} parent=1 // pred_region
      %s36 = ssub.s32 2048, 2048
      %37 = vsyncadd [#allocation4], %s36
      %s38 = sshll.u32 [#allocation3], 4
      %s39 = int_to_ptr.vmem [resolvable:$true] %s38
      %44 = dma.hbm_to_vmem [thread:$0]  %s6, 2048, %s39, [#allocation4], 64, 64, 4
    $region29: #{tpu_custom_call.1} parent=1 // pred_fallthru
      _
    // Predicated region
    $region30: #{tpu_custom_call.1} parent=1 // pred_check
      _
    $region31: #{tpu_custom_call.1} parent=1 // pred_check_branch
      %46 = sbr.rel (0) target = $region33
    $region32: #{tpu_custom_call.1} parent=1 // pred_region
      _
    $region33: #{tpu_custom_call.1} parent=1 // pred_fallthru
      _
    // Predicated region
    $region34: #{tpu_custom_call.1} parent=1 // pred_check
      _
    $region35: #{tpu_custom_call.1} parent=1 // pred_check_branch
      %48 = sbr.rel (0) target = $region37
    $region36: #{tpu_custom_call.1} parent=1 // pred_region
      %s50 = ssub.s32 1024, 1024
      %51 = vsyncadd [#allocation6], %s50
      %s52 = sshll.u32 [#allocation5], 4
      %s53 = int_to_ptr.vmem [resolvable:$true] %s52
      %58 = dma.hbm_to_vmem [thread:$0]  %s8, 1024, %s53, [#allocation6], 64, 64, 4
    $region37: #{tpu_custom_call.1} parent=1 // pred_fallthru
      _
    // Predicated region
    $region38: #{tpu_custom_call.1} parent=1 // pred_check
      _
    $region39: #{tpu_custom_call.1} parent=1 // pred_check_branch
      %60 = sbr.rel (0) target = $region41
    $region40: #{tpu_custom_call.1} parent=1 // pred_region
      _
    $region41: #{tpu_custom_call.1} parent=1 // pred_fallthru
      _
    // Predicated region
    $region42: #{tpu_custom_call.1} parent=1 // pred_check
      _
    $region43: #{tpu_custom_call.1} parent=1 // pred_check_branch
      %62 = sbr.rel (0) target = $region45
    $region44: #{tpu_custom_call.1} parent=1 // pred_region
      _
    $region45: #{tpu_custom_call.1} parent=1 // pred_fallthru
      _
    // Predicated region
    $region46: #{tpu_custom_call.1} parent=1 // pred_check
      _
    $region47: #{tpu_custom_call.1} parent=1 // pred_check_branch
      %64 = sbr.rel (0) target = $region49
    $region48: #{tpu_custom_call.1} parent=1 // pred_region
      _
    $region49: #{tpu_custom_call.1} parent=1 // pred_fallthru
      _
    // Predicated region
    $region50: #{tpu_custom_call.1} parent=1 // pred_check
      _
    $region51: #{tpu_custom_call.1} parent=1 // pred_check_branch
      %66 = sbr.rel (0) target = $region53
    $region52: #{tpu_custom_call.1} parent=1 // pred_region
      _
    $region53: #{tpu_custom_call.1} parent=1 // pred_fallthru
      _
    // Predicated region
    $region54: #{tpu_custom_call.1} parent=1 // pred_check
      _
    $region55: #{tpu_custom_call.1} parent=1 // pred_check_branch
      %68 = sbr.rel (0) target = $region57
    $region56: #{tpu_custom_call.1} parent=1 // pred_region
      %69 = dma.done [#allocation4], 2048
    $region57: #{tpu_custom_call.1} parent=1 // pred_fallthru
      _
    // Predicated region
    $region58: #{tpu_custom_call.1} parent=1 // pred_check
      _
    $region59: #{tpu_custom_call.1} parent=1 // pred_check_branch
      %71 = sbr.rel (0) target = $region61
    $region60: #{tpu_custom_call.1} parent=1 // pred_region
      %72 = dma.done [#allocation6], 1024
    $region61: #{tpu_custom_call.1} parent=1 // pred_fallthru
      _
    %v74 = vld [vmem:[%s0] sm:$0xff]
    %v75 = vpack.c.bf16 %v74, %v74
    %v76 = vld [vmem:[%s3] sm:$0xf]
    %v77 = vld [vmem:[%s3 + $0x4] sm:$0xf]
    %v78 = vld [vmem:[%s1] sm:$0xff]
    %v79 = vpack.c.bf16 %v78, %v78
    %v80 = vld [vmem:[%s4] sm:$0x3]
    %vm81 = vcmask 31744
    %v83 = vsel %vm81, %v79, 0
    %vm85 = vcmask 1041408
    %v87 = vsel %vm85, %v80, 0
    %89 = vmatprep.subr.bf16.mxu0 0
    %90 = vmatpush1.bf16.msra.mxu0 %v87
    %91 = vmatprep.subr.bf16.mxu0 0
    %92 = vmatpush1.bf16.msra.mxu0 0
    %93 = vmatprep.subr.bf16.mxu0 0
    %94 = vmatpush1.bf16.msra.mxu0 0
    %95 = vmatprep.subr.bf16.mxu0 0
    %96 = vmatpush1.bf16.msra.mxu0 0
    %97 = vmatprep.subr.bf16.mxu0 0
    %98 = vmatpush1.bf16.msra.mxu0 0
    %99 = vmatprep.subr.bf16.mxu0 0
    %100 = vmatpush1.bf16.msra.mxu0 0
    %101 = vmatprep.subr.bf16.mxu0 0
    %102 = vmatpush1.bf16.msra.mxu0 0
    %103 = vmatprep.subr.bf16.mxu0 0
    %104 = vmatpush1.bf16.msra.mxu0 0
    %105 = vmatprep.subr.bf16.mxu0 0
    %106 = vmatpush1.bf16.msra.mxu0 0
    %107 = vmatprep.subr.bf16.mxu0 0
    %108 = vmatpush1.bf16.msra.mxu0 0
    %109 = vmatprep.subr.bf16.mxu0 0
    %110 = vmatpush1.bf16.msra.mxu0 0
    %111 = vmatprep.subr.bf16.mxu0 0
    %112 = vmatpush1.bf16.msra.mxu0 0
    %113 = vmatprep.subr.bf16.mxu0 0
    %114 = vmatpush1.bf16.msra.mxu0 0
    %115 = vmatprep.subr.bf16.mxu0 0
    %116 = vmatpush1.bf16.msra.mxu0 0
    %117 = vmatprep.subr.bf16.mxu0 0
    %118 = vmatpush1.bf16.msra.mxu0 0
    %119 = vmatprep.subr.bf16.mxu0 0
    %120 = vmatpush1.bf16.msra.mxu0 0
    %121 = vmatprep.mubr.bf16.mxu0 0
    %122 = vmatmul.mubr.bf16.gmra.mrb[0].mxu0 %v83
    %v123 = vpop.f32.mrb[0].mxu0
    %v124 = vadd.f32 0.0, %v123
    %v125 = vpop.f32.mrb[0].mxu0
    %v126 = vpop.f32.mrb[0].mxu0
    %v127 = vpop.f32.mrb[0].mxu0
    %128 = vdwg.mxu0
    %v131 = vunpack.c.l.b16 %v76
    %v132 = vunpack.c.l.b16 %v77
    %v133 = vpack.c.b16 %v132, %v131
    %vm135 = vcmask 130048
    %v137 = vsel %vm135, %v75, 0
    %139 = vmatprep.subr.bf16.mxu0 0
    %140 = vmatpush1.bf16.msra.mxu0 %v133
    %141 = vmatprep.subr.bf16.mxu0 0
    %142 = vmatpush1.bf16.msra.mxu0 0
    %143 = vmatprep.subr.bf16.mxu0 0
    %144 = vmatpush1.bf16.msra.mxu0 0
    %145 = vmatprep.subr.bf16.mxu0 0
    %146 = vmatpush1.bf16.msra.mxu0 0
    %147 = vmatprep.subr.bf16.mxu0 0
    %148 = vmatpush1.bf16.msra.mxu0 0
    %149 = vmatprep.subr.bf16.mxu0 0
    %150 = vmatpush1.bf16.msra.mxu0 0
    %151 = vmatprep.subr.bf16.mxu0 0
    %152 = vmatpush1.bf16.msra.mxu0 0
    %153 = vmatprep.subr.bf16.mxu0 0
    %154 = vmatpush1.bf16.msra.mxu0 0
    %155 = vmatprep.subr.bf16.mxu0 0
    %156 = vmatpush1.bf16.msra.mxu0 0
    %157 = vmatprep.subr.bf16.mxu0 0
    %158 = vmatpush1.bf16.msra.mxu0 0
    %159 = vmatprep.subr.bf16.mxu0 0
    %160 = vmatpush1.bf16.msra.mxu0 0
    %161 = vmatprep.subr.bf16.mxu0 0
    %162 = vmatpush1.bf16.msra.mxu0 0
    %163 = vmatprep.subr.bf16.mxu0 0
    %164 = vmatpush1.bf16.msra.mxu0 0
    %165 = vmatprep.subr.bf16.mxu0 0
    %166 = vmatpush1.bf16.msra.mxu0 0
    %167 = vmatprep.subr.bf16.mxu0 0
    %168 = vmatpush1.bf16.msra.mxu0 0
    %169 = vmatprep.subr.bf16.mxu0 0
    %170 = vmatpush1.bf16.msra.mxu0 0
    %171 = vmatprep.mubr.bf16.mxu0 0
    %172 = vmatmul.mubr.bf16.gmra.mrb[0].mxu0 %v137
    %v173 = vpop.f32.mrb[0].mxu0
    %v174 = vadd.f32 %v124, %v173
    %v175 = vpop.f32.mrb[0].mxu0
    %v176 = vpop.f32.mrb[0].mxu0
    %v177 = vpop.f32.mrb[0].mxu0
    %178 = vdwg.mxu0
    %v179 = vld [vmem:[%s5] sm:$0x1]
    %v181 = vlaneseq
    %v182 = vshrl.u32 %v181, 7
    %v183 = vsub.s32 0, %v182
    %v184 = vrot.slane %v179, %v183
    %v186 = vadd.f32 %v174, %v184
    %v187 = vmax.f32 %v186, 0.0
    %v188 = vpack.c.bf16 %v187, %v187
    %v189 = vld [vmem:[#allocation3] sm:$0xf]
    %v190 = vld [vmem:[#allocation3 + $0x4] sm:$0xf]
    %v191 = vld [vmem:[#allocation3 + $0x8] sm:$0xf]
    %v192 = vld [vmem:[#allocation3 + $0xc] sm:$0xf]
    %v193 = vld [vmem:[#allocation3 + $0x10] sm:$0xf]
    %v194 = vld [vmem:[#allocation3 + $0x14] sm:$0xf]
    %v195 = vld [vmem:[#allocation3 + $0x18] sm:$0xf]
    %v196 = vld [vmem:[#allocation3 + $0x1c] sm:$0xf]
    %v197 = vld [vmem:[#allocation3 + $0x20] sm:$0xf]
    %v198 = vld [vmem:[#allocation3 + $0x24] sm:$0xf]
    %v199 = vld [vmem:[#allocation3 + $0x28] sm:$0xf]
    %v200 = vld [vmem:[#allocation3 + $0x2c] sm:$0xf]
    %v201 = vld [vmem:[#allocation3 + $0x30] sm:$0xf]
    %v202 = vld [vmem:[#allocation3 + $0x34] sm:$0xf]
    %v203 = vld [vmem:[#allocation3 + $0x38] sm:$0xf]
    %v204 = vld [vmem:[#allocation3 + $0x3c] sm:$0xf]
    %v205 = vld [vmem:[%s7] sm:$0x1]
    %v207 = vlaneseq
    %v208 = vshrl.u32 %v207, 7
    %v209 = vsub.s32 0, %v208
    %v210 = vrot.slane %v205, %v209
    %v228 = vunpack.c.l.b16 %v189
    %v229 = vunpack.c.l.b16 %v190
    %v230 = vunpack.c.l.b16 %v191
    %v231 = vunpack.c.l.b16 %v192
    %v232 = vunpack.c.l.b16 %v193
    %v233 = vunpack.c.l.b16 %v194
    %v234 = vunpack.c.l.b16 %v195
    %v235 = vunpack.c.l.b16 %v196
    %v236 = vunpack.c.l.b16 %v197
    %v237 = vunpack.c.l.b16 %v198
    %v238 = vunpack.c.l.b16 %v199
    %v239 = vunpack.c.l.b16 %v200
    %v240 = vunpack.c.l.b16 %v201
    %v241 = vunpack.c.l.b16 %v202
    %v242 = vunpack.c.l.b16 %v203
    %v243 = vunpack.c.l.b16 %v204
    %v244 = vpack.c.b16 %v229, %v228
    %v245 = vpack.c.b16 %v231, %v230
    %v246 = vpack.c.b16 %v233, %v232
    %v247 = vpack.c.b16 %v235, %v234
    %v248 = vpack.c.b16 %v237, %v236
    %v249 = vpack.c.b16 %v239, %v238
    %v250 = vpack.c.b16 %v241, %v240
    %v251 = vpack.c.b16 %v243, %v242
    %260 = vmatprep.subr.bf16.mxu0 0
    %261 = vmatpush1.bf16.msra.mxu0 %v244
    %262 = vmatprep.subr.bf16.mxu0 0
    %263 = vmatpush1.bf16.msra.mxu0 %v245
    %264 = vmatprep.subr.bf16.mxu0 0
    %265 = vmatpush1.bf16.msra.mxu0 %v246
    %266 = vmatprep.subr.bf16.mxu0 0
    %267 = vmatpush1.bf16.msra.mxu0 %v247
    %268 = vmatprep.subr.bf16.mxu0 0
    %269 = vmatpush1.bf16.msra.mxu0 %v248
    %270 = vmatprep.subr.bf16.mxu0 0
    %271 = vmatpush1.bf16.msra.mxu0 %v249
    %272 = vmatprep.subr.bf16.mxu0 0
    %273 = vmatpush1.bf16.msra.mxu0 %v250
    %274 = vmatprep.subr.bf16.mxu0 0
    %275 = vmatpush1.bf16.msra.mxu0 %v251
    %276 = vmatprep.subr.bf16.mxu0 0
    %277 = vmatpush1.bf16.msra.mxu0 0
    %278 = vmatprep.subr.bf16.mxu0 0
    %279 = vmatpush1.bf16.msra.mxu0 0
    %280 = vmatprep.subr.bf16.mxu0 0
    %281 = vmatpush1.bf16.msra.mxu0 0
    %282 = vmatprep.subr.bf16.mxu0 0
    %283 = vmatpush1.bf16.msra.mxu0 0
    %284 = vmatprep.subr.bf16.mxu0 0
    %285 = vmatpush1.bf16.msra.mxu0 0
    %286 = vmatprep.subr.bf16.mxu0 0
    %287 = vmatpush1.bf16.msra.mxu0 0
    %288 = vmatprep.subr.bf16.mxu0 0
    %289 = vmatpush1.bf16.msra.mxu0 0
    %290 = vmatprep.subr.bf16.mxu0 0
    %291 = vmatpush1.bf16.msra.mxu0 0
    %292 = vmatprep.mubr.bf16.mxu0 0
    %293 = vmatmul.mubr.bf16.gmra.mrb[0].mxu0 %v188
    %v294 = vpop.f32.mrb[0].mxu0
    %v295 = vadd.f32 %v210, %v294
    %v296 = vpop.f32.mrb[0].mxu0
    %v297 = vpop.f32.mrb[0].mxu0
    %v298 = vpop.f32.mrb[0].mxu0
    %299 = vdwg.mxu0
    %v300 = vmax.f32 %v295, 0.0
    %v301 = vpack.c.bf16 %v300, %v300
    %s302 = scalar_lea.vmem [#allocation3], 64
    %v303 = vld [vmem:[%s302] sm:$0xf]
    %v304 = vld [vmem:[%s302 + $0x4] sm:$0xf]
    %v305 = vld [vmem:[%s302 + $0x8] sm:$0xf]
    %v306 = vld [vmem:[%s302 + $0xc] sm:$0xf]
    %v307 = vld [vmem:[%s302 + $0x10] sm:$0xf]
    %v308 = vld [vmem:[%s302 + $0x14] sm:$0xf]
    %v309 = vld [vmem:[%s302 + $0x18] sm:$0xf]
    %v310 = vld [vmem:[%s302 + $0x1c] sm:$0xf]
    %v311 = vld [vmem:[%s302 + $0x20] sm:$0xf]
    %v312 = vld [vmem:[%s302 + $0x24] sm:$0xf]
    %v313 = vld [vmem:[%s302 + $0x28] sm:$0xf]
    %v314 = vld [vmem:[%s302 + $0x2c] sm:$0xf]
    %v315 = vld [vmem:[%s302 + $0x30] sm:$0xf]
    %v316 = vld [vmem:[%s302 + $0x34] sm:$0xf]
    %v317 = vld [vmem:[%s302 + $0x38] sm:$0xf]
    %v318 = vld [vmem:[%s302 + $0x3c] sm:$0xf]
    %s319 = scalar_lea.vmem %s7, 1
    %v320 = vld [vmem:[%s319] sm:$0x1]
    %v322 = vlaneseq
    %v323 = vshrl.u32 %v322, 7
    %v324 = vsub.s32 0, %v323
    %v325 = vrot.slane %v320, %v324
    %v343 = vunpack.c.l.b16 %v303
    %v344 = vunpack.c.l.b16 %v304
    %v345 = vunpack.c.l.b16 %v305
    %v346 = vunpack.c.l.b16 %v306
    %v347 = vunpack.c.l.b16 %v307
    %v348 = vunpack.c.l.b16 %v308
    %v349 = vunpack.c.l.b16 %v309
    %v350 = vunpack.c.l.b16 %v310
    %v351 = vunpack.c.l.b16 %v311
    %v352 = vunpack.c.l.b16 %v312
    %v353 = vunpack.c.l.b16 %v313
    %v354 = vunpack.c.l.b16 %v314
    %v355 = vunpack.c.l.b16 %v315
    %v356 = vunpack.c.l.b16 %v316
    %v357 = vunpack.c.l.b16 %v317
    %v358 = vunpack.c.l.b16 %v318
    %v359 = vpack.c.b16 %v344, %v343
    %v360 = vpack.c.b16 %v346, %v345
    %v361 = vpack.c.b16 %v348, %v347
    %v362 = vpack.c.b16 %v350, %v349
    %v363 = vpack.c.b16 %v352, %v351
    %v364 = vpack.c.b16 %v354, %v353
    %v365 = vpack.c.b16 %v356, %v355
    %v366 = vpack.c.b16 %v358, %v357
    %375 = vmatprep.subr.bf16.mxu0 0
    %376 = vmatpush1.bf16.msra.mxu0 %v359
    %377 = vmatprep.subr.bf16.mxu0 0
    %378 = vmatpush1.bf16.msra.mxu0 %v360
    %379 = vmatprep.subr.bf16.mxu0 0
    %380 = vmatpush1.bf16.msra.mxu0 %v361
    %381 = vmatprep.subr.bf16.mxu0 0
    %382 = vmatpush1.bf16.msra.mxu0 %v362
    %383 = vmatprep.subr.bf16.mxu0 0
    %384 = vmatpush1.bf16.msra.mxu0 %v363
    %385 = vmatprep.subr.bf16.mxu0 0
    %386 = vmatpush1.bf16.msra.mxu0 %v364
    %387 = vmatprep.subr.bf16.mxu0 0
    %388 = vmatpush1.bf16.msra.mxu0 %v365
    %389 = vmatprep.subr.bf16.mxu0 0
    %390 = vmatpush1.bf16.msra.mxu0 %v366
    %391 = vmatprep.subr.bf16.mxu0 0
    %392 = vmatpush1.bf16.msra.mxu0 0
    %393 = vmatprep.subr.bf16.mxu0 0
    %394 = vmatpush1.bf16.msra.mxu0 0
    %395 = vmatprep.subr.bf16.mxu0 0
    %396 = vmatpush1.bf16.msra.mxu0 0
    %397 = vmatprep.subr.bf16.mxu0 0
    %398 = vmatpush1.bf16.msra.mxu0 0
    %399 = vmatprep.subr.bf16.mxu0 0
    %400 = vmatpush1.bf16.msra.mxu0 0
    %401 = vmatprep.subr.bf16.mxu0 0
    %402 = vmatpush1.bf16.msra.mxu0 0
    %403 = vmatprep.subr.bf16.mxu0 0
    %404 = vmatpush1.bf16.msra.mxu0 0
    %405 = vmatprep.subr.bf16.mxu0 0
    %406 = vmatpush1.bf16.msra.mxu0 0
    %407 = vmatprep.mubr.bf16.mxu0 0
    %408 = vmatmul.mubr.bf16.gmra.mrb[0].mxu0 %v301
    %v409 = vpop.f32.mrb[0].mxu0
    %v410 = vadd.f32 %v325, %v409
    %v411 = vpop.f32.mrb[0].mxu0
    %v412 = vpop.f32.mrb[0].mxu0
    %v413 = vpop.f32.mrb[0].mxu0
    %414 = vdwg.mxu0
    %v415 = vmax.f32 %v410, 0.0
    %v416 = vpack.c.bf16 %v415, %v415
    %v417 = vld [vmem:[#allocation5] sm:$0xf]
    %v418 = vld [vmem:[#allocation5 + $0x4] sm:$0xf]
    %v419 = vld [vmem:[#allocation5 + $0x8] sm:$0xf]
    %v420 = vld [vmem:[#allocation5 + $0xc] sm:$0xf]
    %v421 = vld [vmem:[#allocation5 + $0x10] sm:$0xf]
    %v422 = vld [vmem:[#allocation5 + $0x14] sm:$0xf]
    %v423 = vld [vmem:[#allocation5 + $0x18] sm:$0xf]
    %v424 = vld [vmem:[#allocation5 + $0x1c] sm:$0xf]
    %v425 = vld [vmem:[#allocation5 + $0x20] sm:$0xf]
    %v426 = vld [vmem:[#allocation5 + $0x24] sm:$0xf]
    %v427 = vld [vmem:[#allocation5 + $0x28] sm:$0xf]
    %v428 = vld [vmem:[#allocation5 + $0x2c] sm:$0xf]
    %v429 = vld [vmem:[#allocation5 + $0x30] sm:$0xf]
    %v430 = vld [vmem:[#allocation5 + $0x34] sm:$0xf]
    %v431 = vld [vmem:[#allocation5 + $0x38] sm:$0xf]
    %v432 = vld [vmem:[#allocation5 + $0x3c] sm:$0xf]
    %v433 = vld [vmem:[%s9] sm:$0x1]
    %v435 = vlaneseq
    %v436 = vshrl.u32 %v435, 7
    %v437 = vsub.s32 0, %v436
    %v438 = vrot.slane %v433, %v437
    %v456 = vunpack.c.l.b16 %v417
    %v457 = vunpack.c.l.b16 %v418
    %v458 = vunpack.c.l.b16 %v419
    %v459 = vunpack.c.l.b16 %v420
    %v460 = vunpack.c.l.b16 %v421
    %v461 = vunpack.c.l.b16 %v422
    %v462 = vunpack.c.l.b16 %v423
    %v463 = vunpack.c.l.b16 %v424
    %v464 = vunpack.c.l.b16 %v425
    %v465 = vunpack.c.l.b16 %v426
    %v466 = vunpack.c.l.b16 %v427
    %v467 = vunpack.c.l.b16 %v428
    %v468 = vunpack.c.l.b16 %v429
    %v469 = vunpack.c.l.b16 %v430
    %v470 = vunpack.c.l.b16 %v431
    %v471 = vunpack.c.l.b16 %v432
    %v472 = vpack.c.b16 %v457, %v456
    %v473 = vpack.c.b16 %v459, %v458
    %v474 = vpack.c.b16 %v461, %v460
    %v475 = vpack.c.b16 %v463, %v462
    %v476 = vpack.c.b16 %v465, %v464
    %v477 = vpack.c.b16 %v467, %v466
    %v478 = vpack.c.b16 %v469, %v468
    %v479 = vpack.c.b16 %v471, %v470
    %488 = vmatprep.subr.bf16.mxu0 0
    %489 = vmatpush1.bf16.msra.mxu0 %v472
    %490 = vmatprep.subr.bf16.mxu0 0
    %491 = vmatpush1.bf16.msra.mxu0 %v473
    %492 = vmatprep.subr.bf16.mxu0 0
    %493 = vmatpush1.bf16.msra.mxu0 %v474
    %494 = vmatprep.subr.bf16.mxu0 0
    %495 = vmatpush1.bf16.msra.mxu0 %v475
    %496 = vmatprep.subr.bf16.mxu0 0
    %497 = vmatpush1.bf16.msra.mxu0 %v476
    %498 = vmatprep.subr.bf16.mxu0 0
    %499 = vmatpush1.bf16.msra.mxu0 %v477
    %500 = vmatprep.subr.bf16.mxu0 0
    %501 = vmatpush1.bf16.msra.mxu0 %v478
    %502 = vmatprep.subr.bf16.mxu0 0
    %503 = vmatpush1.bf16.msra.mxu0 %v479
    %504 = vmatprep.subr.bf16.mxu0 0
    %505 = vmatpush1.bf16.msra.mxu0 0
    %506 = vmatprep.subr.bf16.mxu0 0
    %507 = vmatpush1.bf16.msra.mxu0 0
    %508 = vmatprep.subr.bf16.mxu0 0
    %509 = vmatpush1.bf16.msra.mxu0 0
    %510 = vmatprep.subr.bf16.mxu0 0
    %511 = vmatpush1.bf16.msra.mxu0 0
    %512 = vmatprep.subr.bf16.mxu0 0
    %513 = vmatpush1.bf16.msra.mxu0 0
    %514 = vmatprep.subr.bf16.mxu0 0
    %515 = vmatpush1.bf16.msra.mxu0 0
    %516 = vmatprep.subr.bf16.mxu0 0
    %517 = vmatpush1.bf16.msra.mxu0 0
    %518 = vmatprep.subr.bf16.mxu0 0
    %519 = vmatpush1.bf16.msra.mxu0 0
    %520 = vmatprep.mubr.bf16.mxu0 0
    %521 = vmatmul.mubr.bf16.gmra.mrb[0].mxu0 %v416
    %v522 = vpop.f32.mrb[0].mxu0
    %v523 = vadd.f32 %v438, %v522
    %v524 = vpop.f32.mrb[0].mxu0
    %v525 = vpop.f32.mrb[0].mxu0
    %v526 = vpop.f32.mrb[0].mxu0
    %527 = vdwg.mxu0
    %v528 = vmax.f32 %v523, 0.0
    %v529 = vld [vmem:[%s10] sm:$0x1]
    %v531 = vlaneseq
    %v532 = vshrl.u32 %v531, 7
    %v533 = vsub.s32 0, %v532
    %v534 = vrot.slane %v529, %v533
    %v536 = vmul.f32 %v528, %v534
    %537 = vadd.xlane.f32.xlu0 %v536
    %v538 = vpop.xlane.xlu0 %537
    %v539 = vld [vmem:[%s2] sm:$0xff]
    %v540 = vld [vmem:[%s11] sm:$0x1]
    %v542 = vlaneseq
    %v543 = vshrl.u32 %v542, 7
    %v544 = vsub.s32 0, %v543
    %v545 = vrot.slane %v540, %v544
    %v547 = vmul.f32 %v539, %v545
    %v548 = vsel %vm135, %v547, 0.0
    %549 = vadd.xlane.f32.xlu0 %v548
    %v550 = vpop.xlane.xlu0 %549
    %v551 = vadd.f32 %v538, %v550
    %s552 = sld [smem:[#allocation2]]
    %v553 = vstv %s552
    %v554 = vadd.f32 %v551, %v553
    %v555 = vxor.u32 %v554, 2147483648
    %v556 = vmul.f32 %v555, 1.442695
    %v557 = vpow.pop %v556
    %v558 = vadd.f32 %v557, 1.0
    %v559 = vrcp.pop %v558
    %v560 = vmul.f32 1.0, %v559
    %vm561 = vcmask 7168
    %562 = vst.msk [vmem:[%s13] sm:$0xff] %vm561, %v560
    // Predicated region
    $region62: #{tpu_custom_call.1} parent=1 // pred_check
      _
    $region63: #{tpu_custom_call.1} parent=1 // pred_check_branch
      %564 = sbr.rel (0) target = $region65
    $region64: #{tpu_custom_call.1} parent=1 // pred_region
      _
    $region65: #{tpu_custom_call.1} parent=1 // pred_fallthru
      _
    // Predicated region
    $region66: #{tpu_custom_call.1} parent=1 // pred_check
      _
    $region67: #{tpu_custom_call.1} parent=1 // pred_check_branch
      %566 = sbr.rel (0) target = $region69
    $region68: #{tpu_custom_call.1} parent=1 // pred_region
      _
    $region69: #{tpu_custom_call.1} parent=1 // pred_fallthru
      _
    %567 = vsyncpa [#allocation4], 1
    %568 = vsyncpa [#allocation6], 1

</llo_original>
